<compile_context>
chip_gen: v6e
topology: v6e:2x2x1
jax: 0.10.0
libtpu: 0.0.40
codegen_flags: <defaults>
</compile_context>

<pallas_src>
import jax
import jax.numpy as jnp
from jax.experimental import pallas as pl
from jax.experimental.pallas import tpu as pltpu

_LANE = 128                      # vreg lane width
_ROW_MULT = 32                   # block_rows multiple: sublane packing safe for f32/bf16/int8
_MIN_BLOCK_ROWS = 256            # never split below this (per-step overhead dominates)
_TARGET_STEPS = 8                # aim for ~8 pipeline steps per kernel
_SPLIT_THRESHOLD_BYTES = 256 * 1024   # below this, one full-extent block is fine


def _round_up(x: int, m: int) -> int:
    return ((x + m - 1) // m) * m


def _max_tile_bytes_for_device() -> int:
    """Per-generation max tile size in bytes (input tile; output tile equal)."""
    try:
        kind = jax.devices()[0].device_kind.lower().replace(" ", "")
    except Exception:
        return 4 << 20
    if "v5lite" in kind or "v5e" in kind:
        return 2 << 20           # 8 MiB total double-buffered: fits 16 MiB scoped default
    if "v6" in kind:
        return 8 << 20           # 32 MiB total: plenty of headroom in 128 MiB VMEM
    # v7x (64 MiB VMEM/TC) and anything unknown: cap tiles at 4 MiB.
    return 4 << 20


def _vmem_limit_for_tile(tile_bytes: int) -> int:
    # in + out, double-buffered (4x tile) plus ~50% headroom; floor 16 MiB.
    return int(max(16 << 20, min(6 * tile_bytes, 100 << 20)))


def _relu_kernel(x_ref, o_ref):
    # Elementwise max(x, 0) on the current VMEM tile (one VPU op per vreg).
    x = x_ref[...]
    o_ref[...] = jnp.maximum(x, jnp.zeros_like(x))


def _relu_2d(x2d: jax.Array, max_tile_bytes: int) -> jax.Array:
    """ReLU over a lane-dense (rows, 128) slab with a pipelined 1-D row grid."""
    rows, lane = x2d.shape
    itemsize = x2d.dtype.itemsize
    row_bytes = lane * itemsize
    slab_bytes = rows * row_bytes

    # Constant-byte tiles regardless of dtype (bf16 -> 2x rows of f32, etc.).
    max_block_rows = max(_MIN_BLOCK_ROWS,
                         (max_tile_bytes // row_bytes) // _ROW_MULT * _ROW_MULT)

    if rows <= _MIN_BLOCK_ROWS or slab_bytes <= _SPLIT_THRESHOLD_BYTES:
        # Small slab: single full-extent block (pipeline overhead would dominate).
        block_rows = rows
    else:
        # Balanced split into ~_TARGET_STEPS steps: keeps read and write DMA
        # overlapped for the whole kernel and avoids a degenerate tiny last block.
        block_rows = _round_up(pl.cdiv(rows, _TARGET_STEPS), _ROW_MULT)
        block_rows = max(_MIN_BLOCK_ROWS, min(block_rows, max_block_rows))

    grid = (pl.cdiv(rows, block_rows),)  # partial last block is masked by Pallas
    vmem_limit = _vmem_limit_for_tile(block_rows * row_bytes)

    return pl.pallas_call(
        _relu_kernel,
        out_shape=jax.ShapeDtypeStruct((rows, lane), x2d.dtype),
        grid_spec=pltpu.PrefetchScalarGridSpec(
            num_scalar_prefetch=0,
            grid=grid,
            in_specs=[pl.BlockSpec((block_rows, lane), lambda i: (i, 0))],
            out_specs=pl.BlockSpec((block_rows, lane), lambda i: (i, 0)),
        ),
        compiler_params=pltpu.CompilerParams(
            # TODO(synk): on v7x verify "parallel" shards this axis across both
            # TensorCores; if not, switch to pltpu.CORE_PARALLEL / core_map.
            dimension_semantics=("parallel",),
            vmem_limit_bytes=vmem_limit,
        ),
    )(x2d)


def _relu_1d(flat: jax.Array, max_tile_bytes: int) -> jax.Array:
    """ReLU over a flat 1-D array of arbitrary length in ONE pallas_call.

    Block length is a multiple of 8*128 so each block maps onto full (8,128)
    vreg tiles; the partial last block (including any <128-element tail) is
    handled by Pallas' masked partial-block load/store — no pad, no concat,
    no extra full HBM pass.
    """
    (n,) = flat.shape
    itemsize = flat.dtype.itemsize
    unit = 8 * _LANE  # 1024 elements = one full (8,128) tile per 32-bit dtype
    max_block = max(unit, ((max_tile_bytes // itemsize) // unit) * unit)

    if n <= unit or n * itemsize <= _SPLIT_THRESHOLD_BYTES:
        block = n
    else:
        block = _round_up(pl.cdiv(n, _TARGET_STEPS), unit)
        block = max(unit, min(block, max_block))

    grid = (pl.cdiv(n, block),)
    vmem_limit = _vmem_limit_for_tile(block * itemsize)

    return pl.pallas_call(
        _relu_kernel,
        out_shape=jax.ShapeDtypeStruct((n,), flat.dtype),
        grid_spec=pltpu.PrefetchScalarGridSpec(
            num_scalar_prefetch=0,
            grid=grid,
            in_specs=[pl.BlockSpec((block,), lambda i: (i,))],
            out_specs=pl.BlockSpec((block,), lambda i: (i,)),
        ),
        compiler_params=pltpu.CompilerParams(
            dimension_semantics=("parallel",),
            vmem_limit_bytes=vmem_limit,
        ),
    )(flat)


def relu(x: jax.Array) -> jax.Array:
    """Forward pass of ReLU: max(x, 0), same shape/dtype as x (NCHW or any)."""
    orig_shape = x.shape
    n = x.size
    if n == 0:
        return x

    flat = jnp.ravel(x)  # free (view) for a contiguous input
    max_tile_bytes = _max_tile_bytes_for_device()

    if n % _LANE == 0:
        # Common aligned case: lane-dense (rows, 128) slab, zero extra HBM traffic.
        out2d = _relu_2d(jnp.reshape(flat, (n // _LANE, _LANE)), max_tile_bytes)
        return jnp.reshape(out2d, orig_shape)

    if n < 8 * _LANE:
        # Tiny misaligned tensor: not worth a kernel launch.
        return jnp.reshape(jnp.maximum(flat, jnp.zeros_like(flat)), orig_shape)

    # Misaligned size: single 1-D pallas_call; masked partial last block covers
    # the tail (no pad / concatenate => no extra full read+write of the tensor).
    return jnp.reshape(_relu_1d(flat, max_tile_bytes), orig_shape)


# TODO(synk): backward() (the module's gradient masking via stored self.s) is
# not implemented here; this file covers the forward pass only.


if __name__ == "__main__":
    key = jax.random.PRNGKey(0)
    # NCHW input, consistent with the PyTorch activation module.
    x = jax.random.normal(key, (2, 4, 16, 16), dtype=jnp.float32)

    y = relu(x)
    jax.block_until_ready(y)

    # Reference check against plain JAX.
    y_ref = jnp.maximum(x, 0.0)
    assert y.shape == x.shape and y.dtype == x.dtype
    assert jnp.allclose(y, y_ref), "ReLU kernel mismatch vs reference"

    print("KERNEL_OK")
</pallas_src>

<mosaic_0001>
module attributes {stable_mosaic.version = 11 : i64} {
  func.func @_relu_kernel(%arg0: i32, %arg1: memref<16x128xf32, #tpu.memory_space<vmem>>, %arg2: memref<16x128xf32, #tpu.memory_space<vmem>>) attributes {dimension_semantics = [#tpu.dimension_semantics<parallel>], iteration_bounds = array<i64: 1>, scalar_prefetch = 0 : i64, scratch_operands = 0 : i64, tpu.core_type = #tpu.core_type<tc>, window_params = [{transform_indices = @transform_0, window_bounds = array<i64: 16, 128>}, {transform_indices = @transform_1, window_bounds = array<i64: 16, 128>}]} {
    %c0 = arith.constant 0 : index
    %c0_0 = arith.constant 0 : index
    %0 = vector.load %arg1[%c0, %c0_0] : memref<16x128xf32, #tpu.memory_space<vmem>>, vector<16x128xf32>
    %cst = arith.constant 0.000000e+00 : f32
    %1 = vector.broadcast %cst : f32 to vector<16x128xf32>
    %2 = arith.maximumf %0, %1 : vector<16x128xf32>
    %c0_1 = arith.constant 0 : index
    %c0_2 = arith.constant 0 : index
    %3 = vector.load %arg2[%c0_1, %c0_2] : memref<16x128xf32, #tpu.memory_space<vmem>>, vector<16x128xf32>
    tpu.vector_store %arg2[%c0_1, %c0_2], %2 {strides = array<i32>} : memref<16x128xf32, #tpu.memory_space<vmem>>, vector<16x128xf32>,
    return
  }
  func.func @transform_0(%arg0: i32) -> (i32, i32) {
    %c0_i32 = arith.constant 0 : i32
    %c0_i32_0 = arith.constant 0 : i32
    return %arg0, %c0_i32 : i32, i32
  }
  func.func @transform_1(%arg0: i32) -> (i32, i32) {
    %c0_i32 = arith.constant 0 : i32
    %c0_i32_0 = arith.constant 0 : i32
    return %arg0, %c0_i32 : i32, i32
  }
}

</mosaic_0001>

<llo_original>
// kernel: tpu_custom_call.1
$region0: #{tpu_custom_call.1}
  #allocation0 [shape = 'u32[]', space=smem, size = 0x4, offset = 0x4, fixed_abs, tag = 'smem constant byte address 0x4 - core index']
  #allocation1 [shape = 'u32[144,128]{1,0:T(1,128)}', space=vmem, size = 0x12000, scoped, tag = 'internal scratch']
  %s0 = inlined_call_operand.hbm [shape: f32[16,128], index: 0, kind: input, shape index: {}]
  %s1 = inlined_call_operand.hbm [shape: f32[16,128], index: 1, kind: output, shape index: {}]
  %s2 = sld [smem:[#allocation0]]
  $region18: #{tpu_custom_call.1} parent=0
    _
  %s4 = ssub.s32 1, %s2
  %s5 = scalar_select 0, %s4, %s2
  $region1: #{tpu_custom_call.1} parent=0
    #allocation2 [shape = 'u8[8192]{0}', space=vmem, size = 0x2000, scoped, tag = 'input window, operand 0, single buffered']
    #allocation3 [shape = 's32[1]{0}', space=sflag, size = 0x4, scoped, tag = 'scoped memory for tpu_custom_call.1']
    #allocation4 [shape = 's32[1]{0}', space=sflag, size = 0x4, scoped, tag = 'scoped memory for tpu_custom_call.1']
    #allocation5 [shape = 'u8[8192]{0}', space=vmem, size = 0x2000, scoped, tag = 'output window, operand 0, single buffered']
    %6 = vsyncpa [#allocation3], 0
    %7 = vsyncpa [#allocation4], 0
    // Predicated region
    $region2: #{tpu_custom_call.1} parent=1 // pred_check
      _
    $region3: #{tpu_custom_call.1} parent=1 // pred_check_branch
      %9 = sbr.rel (0) target = $region5
    $region4: #{tpu_custom_call.1} parent=1 // pred_region
      %s11 = ssub.s32 256, 256
      %12 = vsyncadd [#allocation3], %s11
      %s13 = sshll.u32 [#allocation2], 4
      %s14 = int_to_ptr.vmem [resolvable:$true] %s13
      %19 = dma.hbm_to_vmem [thread:$0]  %s0, 256, %s14, [#allocation3], 128, 128, 8
    $region5: #{tpu_custom_call.1} parent=1 // pred_fallthru
      _
    // Predicated region
    $region6: #{tpu_custom_call.1} parent=1 // pred_check
      _
    $region7: #{tpu_custom_call.1} parent=1 // pred_check_branch
      %21 = sbr.rel (0) target = $region9
    $region8: #{tpu_custom_call.1} parent=1 // pred_region
      %22 = dma.done [#allocation3], 256
    $region9: #{tpu_custom_call.1} parent=1 // pred_fallthru
      _
    %v23 = vld [vmem:[#allocation2] sm:$0xff]
    %v24 = vld [vmem:[#allocation2 + $0x8] sm:$0xff]
    %v25 = vmax.f32 %v23, 0.0
    %v26 = vmax.f32 %v24, 0.0
    %27 = vst [vmem:[#allocation5] sm:$0xff] %v25
    %28 = vst [vmem:[#allocation5 + $0x8] sm:$0xff] %v26
    // Predicated region
    $region10: #{tpu_custom_call.1} parent=1 // pred_check
      _
    $region11: #{tpu_custom_call.1} parent=1 // pred_check_branch
      %30 = sbr.rel (0) target = $region13
    $region12: #{tpu_custom_call.1} parent=1 // pred_region
      %s32 = ssub.s32 256, 256
      %33 = vsyncadd [#allocation4], %s32
      %s34 = sshll.u32 [#allocation5], 4
      %s35 = int_to_ptr.vmem [resolvable:$true] %s34
      %40 = dma.vmem_to_hbm [thread:$0]  %s35, 256, %s1, [#allocation4], 128, 128, 8
    $region13: #{tpu_custom_call.1} parent=1 // pred_fallthru
      _
    // Predicated region
    $region14: #{tpu_custom_call.1} parent=1 // pred_check
      _
    $region15: #{tpu_custom_call.1} parent=1 // pred_check_branch
      %42 = sbr.rel (0) target = $region17
    $region16: #{tpu_custom_call.1} parent=1 // pred_region
      %43 = dma.done [#allocation4], 256
    $region17: #{tpu_custom_call.1} parent=1 // pred_fallthru
      _
    %44 = vsyncpa [#allocation3], 1
    %45 = vsyncpa [#allocation4], 1

</llo_original>
